<compile_context>
chip_gen: v6e
topology: v6e:2x2x1
jax: 0.10.0
libtpu: 0.0.40
codegen_flags: <defaults>
</compile_context>

<pallas_src>
import jax
import jax.numpy as jnp
from jax.experimental import pallas as pl
from jax.experimental.pallas import tpu as pltpu


def _temp_scale_kernel(temp_ref, logits_ref, out_ref):
    # temp_ref: (1,) f32 in SMEM; logits_ref/out_ref: (tm, C) VMEM tiles.
    # Exact scalar reciprocal once per grid step (not pl.reciprocal(approx=True),
    # which would risk the 1e-6 reference tolerance), then a cheap vector mul.
    inv = 1.0 / temp_ref[0]
    out_ref[...] = logits_ref[...] * inv


def _round_up(x: int, m: int) -> int:
    return (x + m - 1) // m * m


def _cdiv(a: int, b: int) -> int:
    return (a + b - 1) // b


def _vmem_budget_bytes() -> int:
    """VMEM we allow ourselves to request: ~75% of per-core capacity.

    Keeps ~25% headroom for Mosaic internal scratch (<=48 MiB on v7x's 64 MiB,
    <=96 MiB on v5e/v6e's 128 MiB).  Falls back to the v7x-safe value if the
    query is unavailable.
    """
    cap = 64 << 20
    try:
        info = pltpu.get_tpu_info()
        cap = int(getattr(info, "vmem_capacity_bytes", cap))
    except Exception:
        pass
    return min(cap * 3 // 4, 96 << 20)


def _pick_tile_rows(num_rows: int, padded_row_bytes: int, vmem_budget: int,
                    target_bytes: int = 8 << 20) -> int:
    """Row tile of ~target_bytes of *padded* data.

    Multiple of 8 sublanes (or the full extent), sized so 4 double-buffered
    tiles + headroom fit the VMEM budget, and (when tiling) adjusted so the
    grid has an even number of steps for v7x megacore sharding.
    """
    max_tile_bytes = max(8 * padded_row_bytes,
                         min(target_bytes, (vmem_budget - (4 << 20)) // 4))
    tm = max(8, (max_tile_bytes // padded_row_bytes) // 8 * 8)
    if tm >= num_rows:
        return num_rows  # full-extent block is always a legal block shape
    steps = _cdiv(num_rows, tm)
    if steps % 2 == 1:
        # shrink slightly so the 'parallel' axis splits evenly across 2 TCs
        tm_even = max(8, _round_up(_cdiv(num_rows, steps + 1), 8))
        if tm_even < num_rows and _cdiv(num_rows, tm_even) % 2 == 0:
            tm = tm_even
    return tm


def _scale_2d(x: jax.Array, temperature: jax.Array, *,
              tm: int | None = None, in_place: bool = False) -> jax.Array:
    """Run the temperature-scaling kernel over a 2D array."""
    R, C = x.shape
    itemsize = jnp.dtype(x.dtype).itemsize

    # Account for hardware padding: sublane dim -> multiple of 8,
    # lane dim -> multiple of 128.
    padded_row_bytes = _round_up(C, 128) * itemsize
    budget = _vmem_budget_bytes()

    if tm is None:
        tm = _pick_tile_rows(R, padded_row_bytes, budget)
    tm = max(1, min(tm, R))

    padded_tile_bytes = _round_up(tm, 8) * padded_row_bytes
    # Double-buffered input + double-buffered output tiles + headroom,
    # clamped to the per-generation budget (never the whole VMEM on v7x).
    vmem_limit = min(max(4 * padded_tile_bytes + (4 << 20), 16 << 20), budget)

    grid = (_cdiv(R, tm),)

    return pl.pallas_call(
        _temp_scale_kernel,
        out_shape=jax.ShapeDtypeStruct((R, C), x.dtype),
        grid_spec=pltpu.PrefetchScalarGridSpec(
            num_scalar_prefetch=0,
            grid=grid,
            in_specs=[
                # scalar temperature, whole array in SMEM for every grid step
                pl.BlockSpec(memory_space=pltpu.MemorySpace.SMEM),
                # one (tm, C) tile of logits per grid step (last may be partial)
                pl.BlockSpec((tm, C), lambda i: (i, 0)),
            ],
            out_specs=pl.BlockSpec((tm, C), lambda i: (i, 0)),
        ),
        input_output_aliases=({1: 0} if in_place else {}),
        compiler_params=pltpu.CompilerParams(
            dimension_semantics=("parallel",),
            vmem_limit_bytes=vmem_limit,
        ),
    )(temperature, x)


def temperature_scale(logits: jax.Array, temperature: jax.Array, *,
                      tm: int | None = None, in_place: bool = False) -> jax.Array:
    """Pallas implementation of ModelWithTemperature.forward.

    logits:      (N, C) float32
    temperature: (1,)   float32 (the nn.Parameter)
    returns:     (N, C) float32 = logits / temperature
    """
    N, C = logits.shape
    total = N * C

    if C % 128 != 0 and total % 128 == 0:
        # Lane-dense slab: row-major reshape is a free view and the op is
        # elementwise-with-scalar, so it is layout-agnostic.  Pick the largest
        # power-of-two lane width (<= 4096) that divides the element count.
        lane = 128
        while lane < 4096 and total % (lane * 2) == 0:
            lane *= 2
        x2 = logits.reshape(total // lane, lane)
        out2 = _scale_2d(x2, temperature, tm=tm, in_place=in_place)
        return out2.reshape(N, C)

    # C already lane-aligned (dense as-is), or total not reshapeable without a
    # pad copy: run directly on (N, C).  VMEM accounting above uses the padded
    # tile size, so the lane-padded fallback stays within the requested limit.
    return _scale_2d(logits, temperature, tm=tm, in_place=in_place)


class ModelWithTemperature:
    """JAX mirror of the PyTorch ModelWithTemperature (forward path only)."""

    def __init__(self, temp: float = 0.5):
        # deterministic parameter init: torch.ones(1) * temp
        self.temperature = jnp.ones((1,), dtype=jnp.float32) * temp

    def __call__(self, logits: jax.Array) -> jax.Array:
        return temperature_scale(logits, self.temperature)

    # TODO(synk): set_temperature (LBFGS fit of temperature on NLL) and the
    # _ECELoss metric are training/eval utilities, not part of forward; not
    # implemented as Pallas kernels here.


if __name__ == "__main__":
    key = jax.random.PRNGKey(0)
    model = ModelWithTemperature(temp=0.5)

    # Case 1: lane-aligned C (direct dense path, single full block).
    N, C = 32, 128
    logits = jax.random.normal(key, (N, C), dtype=jnp.float32)
    out = jax.block_until_ready(model(logits))
    ref = logits / model.temperature[0]
    assert out.shape == (N, C)
    assert out.dtype == jnp.float32
    assert jnp.allclose(out, ref, atol=1e-6, rtol=1e-6)

    # Case 2: small non-128 class count with N*C % 128 == 0
    # -> lane-dense flatten path: (64*10,) viewed as (5, 128).
    logits2 = jax.random.normal(jax.random.PRNGKey(1), (64, 10), dtype=jnp.float32)
    out2 = jax.block_until_ready(model(logits2))
    ref2 = logits2 / model.temperature[0]
    assert out2.shape == (64, 10)
    assert jnp.allclose(out2, ref2, atol=1e-6, rtol=1e-6)

    # Case 3: explicit small tile -> multi-step grid with a partial last block.
    logits3 = jax.random.normal(jax.random.PRNGKey(2), (20, 128), dtype=jnp.float32)
    out3 = jax.block_until_ready(
        temperature_scale(logits3, model.temperature, tm=8))
    ref3 = logits3 / model.temperature[0]
    assert out3.shape == (20, 128)
    assert jnp.allclose(out3, ref3, atol=1e-6, rtol=1e-6)

    # Case 4: non-128 C with N*C not divisible by 128 -> lane-padded fallback
    # (correct padded-VMEM accounting, full-extent block).
    logits4 = jax.random.normal(jax.random.PRNGKey(3), (20, 10), dtype=jnp.float32)
    out4 = jax.block_until_ready(model(logits4))
    ref4 = logits4 / model.temperature[0]
    assert out4.shape == (20, 10)
    assert jnp.allclose(out4, ref4, atol=1e-6, rtol=1e-6)

    print("KERNEL_OK")
</pallas_src>

<mosaic_0001>
module attributes {stable_mosaic.version = 11 : i64} {
  func.func @_temp_scale_kernel(%arg0: i32, %arg1: memref<1xf32, #tpu.memory_space<smem>>, %arg2: memref<32x128xf32, #tpu.memory_space<vmem>>, %arg3: memref<32x128xf32, #tpu.memory_space<vmem>>) attributes {dimension_semantics = [#tpu.dimension_semantics<parallel>], iteration_bounds = array<i64: 1>, scalar_prefetch = 0 : i64, scratch_operands = 0 : i64, tpu.core_type = #tpu.core_type<tc>, window_params = [{transform_indices = @transform_0, window_bounds = array<i64: 1>}, {transform_indices = @transform_1, window_bounds = array<i64: 32, 128>}, {transform_indices = @transform_2, window_bounds = array<i64: 32, 128>}]} {
    %c0 = arith.constant 0 : index
    %0 = memref.load %arg1[%c0] : memref<1xf32, #tpu.memory_space<smem>>
    %cst = arith.constant 1.000000e+00 : f32
    %1 = arith.divf %cst, %0 : f32
    %c0_0 = arith.constant 0 : index
    %c0_1 = arith.constant 0 : index
    %2 = vector.load %arg2[%c0_0, %c0_1] : memref<32x128xf32, #tpu.memory_space<vmem>>, vector<32x128xf32>
    %3 = vector.broadcast %1 : f32 to vector<32x128xf32>
    %4 = arith.mulf %2, %3 : vector<32x128xf32>
    %c0_2 = arith.constant 0 : index
    %c0_3 = arith.constant 0 : index
    %5 = vector.load %arg3[%c0_2, %c0_3] : memref<32x128xf32, #tpu.memory_space<vmem>>, vector<32x128xf32>
    tpu.vector_store %arg3[%c0_2, %c0_3], %4 {strides = array<i32>} : memref<32x128xf32, #tpu.memory_space<vmem>>, vector<32x128xf32>,
    return
  }
  func.func @transform_0(%arg0: i32) -> i32 {
    %c0_i32 = arith.constant 0 : i32
    %c0_i32_0 = arith.constant 0 : i32
    return %c0_i32 : i32
  }
  func.func @transform_1(%arg0: i32) -> (i32, i32) {
    %c0_i32 = arith.constant 0 : i32
    %c0_i32_0 = arith.constant 0 : i32
    return %arg0, %c0_i32 : i32, i32
  }
  func.func @transform_2(%arg0: i32) -> (i32, i32) {
    %c0_i32 = arith.constant 0 : i32
    %c0_i32_0 = arith.constant 0 : i32
    return %arg0, %c0_i32 : i32, i32
  }
}

</mosaic_0001>

<llo_original>
// kernel: tpu_custom_call.1
$region0: #{tpu_custom_call.1}
  #allocation0 [shape = 'u32[]', space=smem, size = 0x4, offset = 0x4, fixed_abs, tag = 'smem constant byte address 0x4 - core index']
  #allocation1 [shape = 'u32[144,128]{1,0:T(1,128)}', space=vmem, size = 0x12000, scoped, tag = 'internal scratch']
  #allocation2 [shape = 'f32[1]{0:T(128)S(6)}', space=smem, size = 0x200, scoped, tag = 'scoped memory for tpu_custom_call.1']
  %s0 = inlined_call_operand.<no memory space> [shape: f32[1], index: 0, kind: input, shape index: {}]
  %s1 = inlined_call_operand.hbm [shape: f32[32,128], index: 1, kind: input, shape index: {}]
  %s2 = inlined_call_operand.hbm [shape: f32[32,128], index: 2, kind: output, shape index: {}]
  %s3 = sld [smem:[#allocation0]]
  $region22: #{tpu_custom_call.1} parent=0
    _
  %s5 = ssub.s32 1, %s3
  %s6 = scalar_select 0, %s5, %s3
  %7 = sst [smem:[#allocation2]] %s0
  $region1: #{tpu_custom_call.1} parent=0
    #allocation3 [shape = 'u8[16384]{0}', space=vmem, size = 0x4000, scoped, tag = 'input window, operand 1, single buffered']
    #allocation4 [shape = 's32[1]{0}', space=sflag, size = 0x4, scoped, tag = 'scoped memory for tpu_custom_call.1']
    #allocation5 [shape = 's32[1]{0}', space=sflag, size = 0x4, scoped, tag = 'scoped memory for tpu_custom_call.1']
    #allocation6 [shape = 'u8[16384]{0}', space=vmem, size = 0x4000, scoped, tag = 'output window, operand 0, single buffered']
    %8 = vsyncpa [#allocation4], 0
    %9 = vsyncpa [#allocation5], 0
    // Predicated region
    $region2: #{tpu_custom_call.1} parent=1 // pred_check
      _
    $region3: #{tpu_custom_call.1} parent=1 // pred_check_branch
      %11 = sbr.rel (0) target = $region5
    $region4: #{tpu_custom_call.1} parent=1 // pred_region
      _
    $region5: #{tpu_custom_call.1} parent=1 // pred_fallthru
      _
    // Predicated region
    $region6: #{tpu_custom_call.1} parent=1 // pred_check
      _
    $region7: #{tpu_custom_call.1} parent=1 // pred_check_branch
      %13 = sbr.rel (0) target = $region9
    $region8: #{tpu_custom_call.1} parent=1 // pred_region
      %s15 = ssub.s32 512, 512
      %16 = vsyncadd [#allocation4], %s15
      %s17 = sshll.u32 [#allocation3], 4
      %s18 = int_to_ptr.vmem [resolvable:$true] %s17
      %23 = dma.hbm_to_vmem [thread:$0]  %s1, 512, %s18, [#allocation4], 128, 128, 8
    $region9: #{tpu_custom_call.1} parent=1 // pred_fallthru
      _
    // Predicated region
    $region10: #{tpu_custom_call.1} parent=1 // pred_check
      _
    $region11: #{tpu_custom_call.1} parent=1 // pred_check_branch
      %25 = sbr.rel (0) target = $region13
    $region12: #{tpu_custom_call.1} parent=1 // pred_region
      %26 = dma.done [#allocation4], 512
    $region13: #{tpu_custom_call.1} parent=1 // pred_fallthru
      _
    %s27 = sld [smem:[#allocation2]]
    %v28 = vstv %s27
    %v29 = vrcp.pop %v28
    %s30 = vtos %v29
    %v31 = vld [vmem:[#allocation3] sm:$0xff]
    %v32 = vld [vmem:[#allocation3 + $0x8] sm:$0xff]
    %v33 = vld [vmem:[#allocation3 + $0x10] sm:$0xff]
    %v34 = vld [vmem:[#allocation3 + $0x18] sm:$0xff]
    %v35 = vstv %s30
    %v36 = vmul.f32 %v31, %v35
    %v37 = vmul.f32 %v32, %v35
    %v38 = vmul.f32 %v33, %v35
    %v39 = vmul.f32 %v34, %v35
    %40 = vst [vmem:[#allocation6] sm:$0xff] %v36
    %41 = vst [vmem:[#allocation6 + $0x8] sm:$0xff] %v37
    %42 = vst [vmem:[#allocation6 + $0x10] sm:$0xff] %v38
    %43 = vst [vmem:[#allocation6 + $0x18] sm:$0xff] %v39
    // Predicated region
    $region14: #{tpu_custom_call.1} parent=1 // pred_check
      _
    $region15: #{tpu_custom_call.1} parent=1 // pred_check_branch
      %45 = sbr.rel (0) target = $region17
    $region16: #{tpu_custom_call.1} parent=1 // pred_region
      %s47 = ssub.s32 512, 512
      %48 = vsyncadd [#allocation5], %s47
      %s49 = sshll.u32 [#allocation6], 4
      %s50 = int_to_ptr.vmem [resolvable:$true] %s49
      %55 = dma.vmem_to_hbm [thread:$0]  %s50, 512, %s2, [#allocation5], 128, 128, 8
    $region17: #{tpu_custom_call.1} parent=1 // pred_fallthru
      _
    // Predicated region
    $region18: #{tpu_custom_call.1} parent=1 // pred_check
      _
    $region19: #{tpu_custom_call.1} parent=1 // pred_check_branch
      %57 = sbr.rel (0) target = $region21
    $region20: #{tpu_custom_call.1} parent=1 // pred_region
      %58 = dma.done [#allocation5], 512
    $region21: #{tpu_custom_call.1} parent=1 // pred_fallthru
      _
    %59 = vsyncpa [#allocation4], 1
    %60 = vsyncpa [#allocation5], 1

</llo_original>
